<compile_context>
chip_gen: v7x
topology: tpu7x:2x2x1
jax: 0.10.0
libtpu: 0.0.40
codegen_flags: <defaults>
</compile_context>

<pallas_src>
import math
import functools

import jax
import jax.numpy as jnp
from jax.experimental import pallas as pl
from jax.experimental.pallas import tpu as pltpu

_EPS = 1e-5
_LANE = 128
_VMEM_SAFE_CEILING = 48 * 1024 * 1024   # conservative ceiling for v7x (64 MiB VMEM/TC)


def _round_up(n, m):
    return ((n + m - 1) // m) * m


def _fused_decoder_kernel(x_ref,
                          w1_ref, gb1_ref,
                          w2_ref, gb2_ref,
                          w3_ref, gb3_ref,
                          w4_ref, gb4_ref,
                          o_ref):
    """Four fused Linear(no-bias) -> BatchNorm1d(train) -> Sigmoid stages.

    All feature dims are zero-padded to 128 lanes in the wrapper, so every
    tile here is lane-dense and the MXU sees full-width operands.  Padded
    columns are inert (y == 0 -> z == 0 -> multiplied by zero weight rows in
    the next layer / sliced off at the end).
    """

    def layer(h, w_ref, gb_ref):
        # h: [B, Din_pad] (matmul dtype), w_ref: [Din_pad, Dout_pad] bf16,
        # gb_ref: [2, Dout_pad] f32 (row 0 = gamma, row 1 = beta).
        y = jnp.dot(h, w_ref[...], preferred_element_type=jnp.float32)
        # BatchNorm1d (training mode): biased batch variance, eps = 1e-5.
        mean = jnp.mean(y, axis=0, keepdims=True)
        centered = y - mean
        var = jnp.mean(centered * centered, axis=0, keepdims=True)
        # Fold gamma into the rsqrt scale: a [1, Dout] multiply instead of a
        # second full [B, Dout] multiply.
        scale = gb_ref[0:1, :] * jax.lax.rsqrt(var + _EPS)
        z = centered * scale + gb_ref[1:2, :]
        # Exact sigmoid via tanh: one EUP transcendental per element.
        return 0.5 * jnp.tanh(0.5 * z) + 0.5

    mm_dtype = w1_ref.dtype
    h = layer(x_ref[...].astype(mm_dtype), w1_ref, gb1_ref)
    h = layer(h.astype(mm_dtype), w2_ref, gb2_ref)
    h = layer(h.astype(mm_dtype), w3_ref, gb3_ref)
    o_ref[...] = layer(h.astype(mm_dtype), w4_ref, gb4_ref)


def decoder_forward(x_padded, padded_params):
    """x_padded: [B, Din0_pad] f32.
    padded_params: sequence of (w_pad [Din_pad, Dout_pad] bf16, gb_pad [2, Dout_pad] f32).
    Returns lane-dense padded output [B, Dout_last_pad] f32."""
    B = x_padded.shape[0]
    d_last_pad = padded_params[-1][0].shape[1]

    args = [x_padded]
    in_specs = [pl.BlockSpec(x_padded.shape, lambda: (0, 0))]
    for (w_pad, gb_pad) in padded_params:
        args += [w_pad, gb_pad]
        in_specs += [pl.BlockSpec(w_pad.shape, lambda: (0, 0)),
                     pl.BlockSpec(gb_pad.shape, lambda: (0, 0))]

    # VMEM budget from the actual shapes: inputs + output + a few live
    # [B, Dout_pad] f32 activation temporaries, with 2x headroom.
    def _nbytes(a):
        return int(a.size) * a.dtype.itemsize

    max_dpad = max(w.shape[1] for (w, _) in padded_params)
    act_bytes = 4 * B * max_dpad * 4                      # live f32 temporaries
    total = sum(_nbytes(a) for a in args) + B * d_last_pad * 4 + act_bytes
    needed = 2 * total + (2 << 20)
    if needed > _VMEM_SAFE_CEILING:
        # TODO(synk): batch-tiled grid with two-pass BatchNorm (per-feature
        # sum/sum-sq scratch over an "arbitrary" reduction axis) for
        # production batch sizes; the single-block fused form holds the whole
        # batch resident in VMEM.
        raise ValueError(
            "Batch too large for the single-block fused decoder "
            f"({needed} bytes VMEM needed); use a batch-tiled two-pass-BN variant.")
    vmem_limit = max(needed, 4 << 20)

    return pl.pallas_call(
        _fused_decoder_kernel,
        out_shape=jax.ShapeDtypeStruct((B, d_last_pad), jnp.float32),
        in_specs=in_specs,
        out_specs=pl.BlockSpec((B, d_last_pad), lambda: (0, 0)),
        compiler_params=pltpu.CompilerParams(vmem_limit_bytes=int(vmem_limit)),
    )(*args)


@functools.partial(jax.jit, static_argnames=("n_in", "n_out", "n_size"))
def decoder_apply(padded_params, x, *, n_in, n_out, n_size):
    """Full Decoder forward: pad -> fused kernel -> slice -> Unflatten."""
    B = x.shape[0]
    din0_pad = padded_params[0][0].shape[0]
    x_pad = jnp.pad(x.astype(jnp.float32), ((0, 0), (0, din0_pad - n_in)))
    out_pad = decoder_forward(x_pad, padded_params)            # [B, Dout_last_pad]
    out = out_pad[:, :n_out]
    # nn.Unflatten(dim=1, [1, n_size, n_size]) -> NCHW (metadata-only reshape).
    return out.reshape(B, 1, n_size, n_size)


class DecoderPallas:
    """JAX/Pallas equivalent of the PyTorch Decoder module (fully fused forward)."""

    def __init__(self, n_in, n_hidden1, n_hidden2, n_hidden3, n_out, key,
                 matmul_dtype=jnp.bfloat16):
        # bf16 MXU operands (f32 accumulation) are the native fast path on
        # v5e/v6e/v7x; all BatchNorm / sigmoid math stays f32.
        self.n_in, self.n_out = n_in, n_out
        self.n_size = math.floor(math.sqrt(n_out))
        dims = [(n_in, n_hidden1), (n_hidden1, n_hidden2),
                (n_hidden2, n_hidden3), (n_hidden3, n_out)]
        ref_params = []      # unpadded, for the pure-JAX reference
        padded_params = []   # zero-padded to 128 lanes, for the kernel
        for (din, dout) in dims:
            key, kw = jax.random.split(key)
            # nn.Linear-style uniform(-1/sqrt(fan_in), 1/sqrt(fan_in)) init.
            bound = 1.0 / math.sqrt(din)
            w = jax.random.uniform(kw, (dout, din), jnp.float32, -bound, bound)
            # Linear bias intentionally omitted: BatchNorm's batch-mean
            # subtraction cancels any per-feature constant (forward-only).
            gamma = jnp.ones((dout,), jnp.float32)   # BatchNorm1d weight init
            beta = jnp.zeros((dout,), jnp.float32)   # BatchNorm1d bias init
            w_t = w.T.astype(matmul_dtype)           # [din, dout]
            ref_params.append((w_t, gamma, beta))

            din_p, dout_p = _round_up(din, _LANE), _round_up(dout, _LANE)
            w_pad = jnp.zeros((din_p, dout_p), matmul_dtype).at[:din, :dout].set(w_t)
            gb_pad = (jnp.zeros((2, dout_p), jnp.float32)
                      .at[0, :dout].set(gamma)
                      .at[1, :dout].set(beta))
            padded_params.append((w_pad, gb_pad))
        self.ref_params = tuple(ref_params)
        self.params = tuple(padded_params)

    def __call__(self, x):
        # Params are passed as a jit argument (pytree), not baked in as statics.
        return decoder_apply(self.params, x,
                             n_in=self.n_in, n_out=self.n_out, n_size=self.n_size)


def _reference_forward(x, ref_params, n_size):
    """Pure-JAX reference (same bf16 matmul, exact sigmoid) for correctness."""
    h = x.astype(jnp.float32)
    for (w_t, gamma, beta) in ref_params:
        y = jnp.dot(h.astype(w_t.dtype), w_t, preferred_element_type=jnp.float32)
        mean = jnp.mean(y, axis=0, keepdims=True)
        var = jnp.mean((y - mean) ** 2, axis=0, keepdims=True)
        z = gamma * (y - mean) * jax.lax.rsqrt(var + _EPS) + beta
        h = jax.nn.sigmoid(z)
    return h.reshape(h.shape[0], 1, n_size, n_size)


if __name__ == "__main__":
    # Small, decoder-consistent sizes: n_out must be a perfect square for Unflatten.
    B = 8
    n_in, n_h1, n_h2, n_h3, n_out = 32, 64, 48, 32, 16   # n_size = 4

    key = jax.random.PRNGKey(0)
    key, kx, kparams = jax.random.split(key, 3)
    x = jax.random.normal(kx, (B, n_in), dtype=jnp.float32)

    decoder = DecoderPallas(n_in, n_h1, n_h2, n_h3, n_out, kparams)
    out = jax.block_until_ready(decoder(x))

    assert out.shape == (B, 1, 4, 4), out.shape
    assert out.dtype == jnp.float32
    assert bool(jnp.all(jnp.isfinite(out)))
    assert bool(jnp.all((out >= 0.0) & (out <= 1.0)))

    # Cross-check against a pure-JAX reference (exact sigmoid -> tight tol).
    ref = _reference_forward(x, decoder.ref_params, decoder.n_size)
    max_err = float(jnp.max(jnp.abs(out - ref)))
    assert bool(jnp.allclose(out, ref, rtol=1e-3, atol=1e-3)), max_err

    print("KERNEL_OK")
</pallas_src>

<mosaic_0001>
module attributes {stable_mosaic.version = 11 : i64} {
  func.func @_fused_decoder_kernel(%arg0: memref<8x128xf32, #tpu.memory_space<vmem>>, %arg1: memref<128x128xbf16, #tpu.memory_space<vmem>>, %arg2: memref<2x128xf32, #tpu.memory_space<vmem>>, %arg3: memref<128x128xbf16, #tpu.memory_space<vmem>>, %arg4: memref<2x128xf32, #tpu.memory_space<vmem>>, %arg5: memref<128x128xbf16, #tpu.memory_space<vmem>>, %arg6: memref<2x128xf32, #tpu.memory_space<vmem>>, %arg7: memref<128x128xbf16, #tpu.memory_space<vmem>>, %arg8: memref<2x128xf32, #tpu.memory_space<vmem>>, %arg9: memref<8x128xf32, #tpu.memory_space<vmem>>) attributes {dimension_semantics = [], scalar_prefetch = 0 : i64, scratch_operands = 0 : i64, tpu.core_type = #tpu.core_type<tc>} {
    %c0 = arith.constant 0 : index
    %c0_0 = arith.constant 0 : index
    %0 = vector.load %arg0[%c0, %c0_0] : memref<8x128xf32, #tpu.memory_space<vmem>>, vector<8x128xf32>
    %1 = arith.truncf %0 : vector<8x128xf32> to vector<8x128xbf16>
    %c0_1 = arith.constant 0 : index
    %c0_2 = arith.constant 0 : index
    %2 = vector.load %arg1[%c0_1, %c0_2] : memref<128x128xbf16, #tpu.memory_space<vmem>>, vector<128x128xbf16>
    %cst = arith.constant dense<0.000000e+00> : vector<8x128xf32>
    %3 = tpu.matmul %1, %2, %cst {dimension_numbers = #tpu.dot_dimension_numbers<[1], [0], [0], [1], [0, 0, 1, 1], [], []>} : vector<8x128xbf16>, vector<128x128xbf16>, vector<8x128xf32> -> vector<8x128xf32>
    %cst_3 = arith.constant dense<0.000000e+00> : vector<128xf32>
    %4 = vector.multi_reduction <add>, %3, %cst_3 [0] : vector<8x128xf32> to vector<128xf32>
    %5 = vector.shape_cast %4 : vector<128xf32> to vector<1x128xf32>
    %cst_4 = arith.constant 8.000000e+00 : f32
    %6 = vector.broadcast %cst_4 : f32 to vector<1x128xf32>
    %7 = arith.divf %5, %6 : vector<1x128xf32>
    %8 = vector.broadcast %7 : vector<1x128xf32> to vector<8x128xf32>
    %9 = arith.subf %3, %8 : vector<8x128xf32>
    %10 = arith.mulf %9, %9 : vector<8x128xf32>
    %cst_5 = arith.constant dense<0.000000e+00> : vector<128xf32>
    %11 = vector.multi_reduction <add>, %10, %cst_5 [0] : vector<8x128xf32> to vector<128xf32>
    %12 = vector.shape_cast %11 : vector<128xf32> to vector<1x128xf32>
    %cst_6 = arith.constant 8.000000e+00 : f32
    %13 = vector.broadcast %cst_6 : f32 to vector<1x128xf32>
    %14 = arith.divf %12, %13 : vector<1x128xf32>
    %c0_7 = arith.constant 0 : index
    %c0_8 = arith.constant 0 : index
    %15 = vector.load %arg2[%c0_7, %c0_8] : memref<2x128xf32, #tpu.memory_space<vmem>>, vector<1x128xf32>
    %cst_9 = arith.constant 9.99999974E-6 : f32
    %16 = vector.broadcast %cst_9 : f32 to vector<1x128xf32>
    %17 = arith.addf %14, %16 : vector<1x128xf32>
    %18 = math.rsqrt %17 : vector<1x128xf32>
    %19 = arith.mulf %15, %18 : vector<1x128xf32>
    %20 = vector.broadcast %19 : vector<1x128xf32> to vector<8x128xf32>
    %21 = arith.mulf %9, %20 : vector<8x128xf32>
    %c1 = arith.constant 1 : index
    %c0_10 = arith.constant 0 : index
    %22 = vector.load %arg2[%c1, %c0_10] : memref<2x128xf32, #tpu.memory_space<vmem>>, vector<1x128xf32>
    %23 = vector.broadcast %22 : vector<1x128xf32> to vector<8x128xf32>
    %24 = arith.addf %21, %23 : vector<8x128xf32>
    %cst_11 = arith.constant 5.000000e-01 : f32
    %25 = vector.broadcast %cst_11 : f32 to vector<8x128xf32>
    %26 = arith.mulf %25, %24 : vector<8x128xf32>
    %27 = math.tanh %26 : vector<8x128xf32>
    %cst_12 = arith.constant 5.000000e-01 : f32
    %28 = vector.broadcast %cst_12 : f32 to vector<8x128xf32>
    %29 = arith.mulf %28, %27 : vector<8x128xf32>
    %cst_13 = arith.constant 5.000000e-01 : f32
    %30 = vector.broadcast %cst_13 : f32 to vector<8x128xf32>
    %31 = arith.addf %29, %30 : vector<8x128xf32>
    %32 = arith.truncf %31 : vector<8x128xf32> to vector<8x128xbf16>
    %c0_14 = arith.constant 0 : index
    %c0_15 = arith.constant 0 : index
    %33 = vector.load %arg3[%c0_14, %c0_15] : memref<128x128xbf16, #tpu.memory_space<vmem>>, vector<128x128xbf16>
    %cst_16 = arith.constant dense<0.000000e+00> : vector<8x128xf32>
    %34 = tpu.matmul %32, %33, %cst_16 {dimension_numbers = #tpu.dot_dimension_numbers<[1], [0], [0], [1], [0, 0, 1, 1], [], []>} : vector<8x128xbf16>, vector<128x128xbf16>, vector<8x128xf32> -> vector<8x128xf32>
    %cst_17 = arith.constant dense<0.000000e+00> : vector<128xf32>
    %35 = vector.multi_reduction <add>, %34, %cst_17 [0] : vector<8x128xf32> to vector<128xf32>
    %36 = vector.shape_cast %35 : vector<128xf32> to vector<1x128xf32>
    %cst_18 = arith.constant 8.000000e+00 : f32
    %37 = vector.broadcast %cst_18 : f32 to vector<1x128xf32>
    %38 = arith.divf %36, %37 : vector<1x128xf32>
    %39 = vector.broadcast %38 : vector<1x128xf32> to vector<8x128xf32>
    %40 = arith.subf %34, %39 : vector<8x128xf32>
    %41 = arith.mulf %40, %40 : vector<8x128xf32>
    %cst_19 = arith.constant dense<0.000000e+00> : vector<128xf32>
    %42 = vector.multi_reduction <add>, %41, %cst_19 [0] : vector<8x128xf32> to vector<128xf32>
    %43 = vector.shape_cast %42 : vector<128xf32> to vector<1x128xf32>
    %cst_20 = arith.constant 8.000000e+00 : f32
    %44 = vector.broadcast %cst_20 : f32 to vector<1x128xf32>
    %45 = arith.divf %43, %44 : vector<1x128xf32>
    %c0_21 = arith.constant 0 : index
    %c0_22 = arith.constant 0 : index
    %46 = vector.load %arg4[%c0_21, %c0_22] : memref<2x128xf32, #tpu.memory_space<vmem>>, vector<1x128xf32>
    %cst_23 = arith.constant 9.99999974E-6 : f32
    %47 = vector.broadcast %cst_23 : f32 to vector<1x128xf32>
    %48 = arith.addf %45, %47 : vector<1x128xf32>
    %49 = math.rsqrt %48 : vector<1x128xf32>
    %50 = arith.mulf %46, %49 : vector<1x128xf32>
    %51 = vector.broadcast %50 : vector<1x128xf32> to vector<8x128xf32>
    %52 = arith.mulf %40, %51 : vector<8x128xf32>
    %c1_24 = arith.constant 1 : index
    %c0_25 = arith.constant 0 : index
    %53 = vector.load %arg4[%c1_24, %c0_25] : memref<2x128xf32, #tpu.memory_space<vmem>>, vector<1x128xf32>
    %54 = vector.broadcast %53 : vector<1x128xf32> to vector<8x128xf32>
    %55 = arith.addf %52, %54 : vector<8x128xf32>
    %cst_26 = arith.constant 5.000000e-01 : f32
    %56 = vector.broadcast %cst_26 : f32 to vector<8x128xf32>
    %57 = arith.mulf %56, %55 : vector<8x128xf32>
    %58 = math.tanh %57 : vector<8x128xf32>
    %cst_27 = arith.constant 5.000000e-01 : f32
    %59 = vector.broadcast %cst_27 : f32 to vector<8x128xf32>
    %60 = arith.mulf %59, %58 : vector<8x128xf32>
    %cst_28 = arith.constant 5.000000e-01 : f32
    %61 = vector.broadcast %cst_28 : f32 to vector<8x128xf32>
    %62 = arith.addf %60, %61 : vector<8x128xf32>
    %63 = arith.truncf %62 : vector<8x128xf32> to vector<8x128xbf16>
    %c0_29 = arith.constant 0 : index
    %c0_30 = arith.constant 0 : index
    %64 = vector.load %arg5[%c0_29, %c0_30] : memref<128x128xbf16, #tpu.memory_space<vmem>>, vector<128x128xbf16>
    %cst_31 = arith.constant dense<0.000000e+00> : vector<8x128xf32>
    %65 = tpu.matmul %63, %64, %cst_31 {dimension_numbers = #tpu.dot_dimension_numbers<[1], [0], [0], [1], [0, 0, 1, 1], [], []>} : vector<8x128xbf16>, vector<128x128xbf16>, vector<8x128xf32> -> vector<8x128xf32>
    %cst_32 = arith.constant dense<0.000000e+00> : vector<128xf32>
    %66 = vector.multi_reduction <add>, %65, %cst_32 [0] : vector<8x128xf32> to vector<128xf32>
    %67 = vector.shape_cast %66 : vector<128xf32> to vector<1x128xf32>
    %cst_33 = arith.constant 8.000000e+00 : f32
    %68 = vector.broadcast %cst_33 : f32 to vector<1x128xf32>
    %69 = arith.divf %67, %68 : vector<1x128xf32>
    %70 = vector.broadcast %69 : vector<1x128xf32> to vector<8x128xf32>
    %71 = arith.subf %65, %70 : vector<8x128xf32>
    %72 = arith.mulf %71, %71 : vector<8x128xf32>
    %cst_34 = arith.constant dense<0.000000e+00> : vector<128xf32>
    %73 = vector.multi_reduction <add>, %72, %cst_34 [0] : vector<8x128xf32> to vector<128xf32>
    %74 = vector.shape_cast %73 : vector<128xf32> to vector<1x128xf32>
    %cst_35 = arith.constant 8.000000e+00 : f32
    %75 = vector.broadcast %cst_35 : f32 to vector<1x128xf32>
    %76 = arith.divf %74, %75 : vector<1x128xf32>
    %c0_36 = arith.constant 0 : index
    %c0_37 = arith.constant 0 : index
    %77 = vector.load %arg6[%c0_36, %c0_37] : memref<2x128xf32, #tpu.memory_space<vmem>>, vector<1x128xf32>
    %cst_38 = arith.constant 9.99999974E-6 : f32
    %78 = vector.broadcast %cst_38 : f32 to vector<1x128xf32>
    %79 = arith.addf %76, %78 : vector<1x128xf32>
    %80 = math.rsqrt %79 : vector<1x128xf32>
    %81 = arith.mulf %77, %80 : vector<1x128xf32>
    %82 = vector.broadcast %81 : vector<1x128xf32> to vector<8x128xf32>
    %83 = arith.mulf %71, %82 : vector<8x128xf32>
    %c1_39 = arith.constant 1 : index
    %c0_40 = arith.constant 0 : index
    %84 = vector.load %arg6[%c1_39, %c0_40] : memref<2x128xf32, #tpu.memory_space<vmem>>, vector<1x128xf32>
    %85 = vector.broadcast %84 : vector<1x128xf32> to vector<8x128xf32>
    %86 = arith.addf %83, %85 : vector<8x128xf32>
    %cst_41 = arith.constant 5.000000e-01 : f32
    %87 = vector.broadcast %cst_41 : f32 to vector<8x128xf32>
    %88 = arith.mulf %87, %86 : vector<8x128xf32>
    %89 = math.tanh %88 : vector<8x128xf32>
    %cst_42 = arith.constant 5.000000e-01 : f32
    %90 = vector.broadcast %cst_42 : f32 to vector<8x128xf32>
    %91 = arith.mulf %90, %89 : vector<8x128xf32>
    %cst_43 = arith.constant 5.000000e-01 : f32
    %92 = vector.broadcast %cst_43 : f32 to vector<8x128xf32>
    %93 = arith.addf %91, %92 : vector<8x128xf32>
    %94 = arith.truncf %93 : vector<8x128xf32> to vector<8x128xbf16>
    %c0_44 = arith.constant 0 : index
    %c0_45 = arith.constant 0 : index
    %95 = vector.load %arg7[%c0_44, %c0_45] : memref<128x128xbf16, #tpu.memory_space<vmem>>, vector<128x128xbf16>
    %cst_46 = arith.constant dense<0.000000e+00> : vector<8x128xf32>
    %96 = tpu.matmul %94, %95, %cst_46 {dimension_numbers = #tpu.dot_dimension_numbers<[1], [0], [0], [1], [0, 0, 1, 1], [], []>} : vector<8x128xbf16>, vector<128x128xbf16>, vector<8x128xf32> -> vector<8x128xf32>
    %cst_47 = arith.constant dense<0.000000e+00> : vector<128xf32>
    %97 = vector.multi_reduction <add>, %96, %cst_47 [0] : vector<8x128xf32> to vector<128xf32>
    %98 = vector.shape_cast %97 : vector<128xf32> to vector<1x128xf32>
    %cst_48 = arith.constant 8.000000e+00 : f32
    %99 = vector.broadcast %cst_48 : f32 to vector<1x128xf32>
    %100 = arith.divf %98, %99 : vector<1x128xf32>
    %101 = vector.broadcast %100 : vector<1x128xf32> to vector<8x128xf32>
    %102 = arith.subf %96, %101 : vector<8x128xf32>
    %103 = arith.mulf %102, %102 : vector<8x128xf32>
    %cst_49 = arith.constant dense<0.000000e+00> : vector<128xf32>
    %104 = vector.multi_reduction <add>, %103, %cst_49 [0] : vector<8x128xf32> to vector<128xf32>
    %105 = vector.shape_cast %104 : vector<128xf32> to vector<1x128xf32>
    %cst_50 = arith.constant 8.000000e+00 : f32
    %106 = vector.broadcast %cst_50 : f32 to vector<1x128xf32>
    %107 = arith.divf %105, %106 : vector<1x128xf32>
    %c0_51 = arith.constant 0 : index
    %c0_52 = arith.constant 0 : index
    %108 = vector.load %arg8[%c0_51, %c0_52] : memref<2x128xf32, #tpu.memory_space<vmem>>, vector<1x128xf32>
    %cst_53 = arith.constant 9.99999974E-6 : f32
    %109 = vector.broadcast %cst_53 : f32 to vector<1x128xf32>
    %110 = arith.addf %107, %109 : vector<1x128xf32>
    %111 = math.rsqrt %110 : vector<1x128xf32>
    %112 = arith.mulf %108, %111 : vector<1x128xf32>
    %113 = vector.broadcast %112 : vector<1x128xf32> to vector<8x128xf32>
    %114 = arith.mulf %102, %113 : vector<8x128xf32>
    %c1_54 = arith.constant 1 : index
    %c0_55 = arith.constant 0 : index
    %115 = vector.load %arg8[%c1_54, %c0_55] : memref<2x128xf32, #tpu.memory_space<vmem>>, vector<1x128xf32>
    %116 = vector.broadcast %115 : vector<1x128xf32> to vector<8x128xf32>
    %117 = arith.addf %114, %116 : vector<8x128xf32>
    %cst_56 = arith.constant 5.000000e-01 : f32
    %118 = vector.broadcast %cst_56 : f32 to vector<8x128xf32>
    %119 = arith.mulf %118, %117 : vector<8x128xf32>
    %120 = math.tanh %119 : vector<8x128xf32>
    %cst_57 = arith.constant 5.000000e-01 : f32
    %121 = vector.broadcast %cst_57 : f32 to vector<8x128xf32>
    %122 = arith.mulf %121, %120 : vector<8x128xf32>
    %cst_58 = arith.constant 5.000000e-01 : f32
    %123 = vector.broadcast %cst_58 : f32 to vector<8x128xf32>
    %124 = arith.addf %122, %123 : vector<8x128xf32>
    %c0_59 = arith.constant 0 : index
    %c0_60 = arith.constant 0 : index
    %125 = vector.load %arg9[%c0_59, %c0_60] : memref<8x128xf32, #tpu.memory_space<vmem>>, vector<8x128xf32>
    tpu.vector_store %arg9[%c0_59, %c0_60], %124 {strides = array<i32>} : memref<8x128xf32, #tpu.memory_space<vmem>>, vector<8x128xf32>,
    return
  }
}

</mosaic_0001>

<llo_original>
// kernel: decoder_apply.1
$region0: #{decoder_apply.1}
  #allocation0 [shape = 'u32[]', space=smem, size = 0x4, offset = 0x4, fixed_abs, tag = 'smem constant byte address 0x4 - core index']
  #allocation1 [shape = 'u32[144,128]{1,0:T(1,128)}', space=vmem, size = 0x12000, scoped, tag = 'internal scratch']
  %s0 = inlined_call_operand.vmem [shape: f32[8,128], index: 0, kind: input, shape index: {}]
  %s1 = inlined_call_operand.hbm [shape: bf16[128,128], index: 1, kind: input, shape index: {}]
  %s2 = inlined_call_operand.vmem [shape: f32[2,128], index: 2, kind: input, shape index: {}]
  %s3 = inlined_call_operand.hbm [shape: bf16[128,128], index: 3, kind: input, shape index: {}]
  %s4 = inlined_call_operand.vmem [shape: f32[2,128], index: 4, kind: input, shape index: {}]
  %s5 = inlined_call_operand.hbm [shape: bf16[128,128], index: 5, kind: input, shape index: {}]
  %s6 = inlined_call_operand.vmem [shape: f32[2,128], index: 6, kind: input, shape index: {}]
  %s7 = inlined_call_operand.hbm [shape: bf16[128,128], index: 7, kind: input, shape index: {}]
  %s8 = inlined_call_operand.vmem [shape: f32[2,128], index: 8, kind: input, shape index: {}]
  %s9 = inlined_call_operand.vmem [shape: f32[8,128], index: 9, kind: output, shape index: {}]
  %s10 = sld [smem:[#allocation0]]
  $region62: #{decoder_apply.1} parent=0
    _
  %s12 = ssub.s32 1, %s10
  %s13 = scalar_select 0, %s12, %s10
  $region1: #{decoder_apply.1} parent=0
    #allocation2 [shape = 'u8[32768]{0}', space=vmem, size = 0x8000, scoped, tag = 'input window, operand 1, single buffered']
    #allocation3 [shape = 's32[1]{0}', space=sflag, size = 0x4, scoped, tag = 'scoped memory for decoder_apply.1']
    #allocation4 [shape = 'u8[32768]{0}', space=vmem, size = 0x8000, scoped, tag = 'input window, operand 3, single buffered']
    #allocation5 [shape = 's32[1]{0}', space=sflag, size = 0x4, scoped, tag = 'scoped memory for decoder_apply.1']
    #allocation6 [shape = 'u8[32768]{0}', space=vmem, size = 0x8000, scoped, tag = 'input window, operand 5, single buffered']
    #allocation7 [shape = 'u8[32768]{0}', space=vmem, size = 0x8000, scoped, tag = 'input window, operand 7, single buffered']
    #allocation8 [shape = 's32[1]{0}', space=sflag, size = 0x4, scoped, tag = 'scoped memory for decoder_apply.1']
    %14 = vsyncpa [#allocation3], 0
    %15 = vsyncpa [#allocation5], 0
    %16 = vsyncpa [#allocation8], 0
    // Predicated region
    $region2: #{decoder_apply.1} parent=1 // pred_check
      _
    $region3: #{decoder_apply.1} parent=1 // pred_check_branch
      %18 = sbr.rel (0) target = $region5
    $region4: #{decoder_apply.1} parent=1 // pred_region
      _
    $region5: #{decoder_apply.1} parent=1 // pred_fallthru
      _
    // Predicated region
    $region6: #{decoder_apply.1} parent=1 // pred_check
      _
    $region7: #{decoder_apply.1} parent=1 // pred_check_branch
      %20 = sbr.rel (0) target = $region9
    $region8: #{decoder_apply.1} parent=1 // pred_region
      %s22 = ssub.s32 1024, 1024
      %23 = vsyncadd [#allocation3], %s22
      %s24 = sshll.u32 [#allocation2], 4
      %s25 = int_to_ptr.vmem [resolvable:$true] %s24
      %30 = dma.hbm_to_vmem [thread:$0]  %s1, 1024, %s25, [#allocation3], 64, 64, 4
    $region9: #{decoder_apply.1} parent=1 // pred_fallthru
      _
    // Predicated region
    $region10: #{decoder_apply.1} parent=1 // pred_check
      _
    $region11: #{decoder_apply.1} parent=1 // pred_check_branch
      %32 = sbr.rel (0) target = $region13
    $region12: #{decoder_apply.1} parent=1 // pred_region
      _
    $region13: #{decoder_apply.1} parent=1 // pred_fallthru
      _
    // Predicated region
    $region14: #{decoder_apply.1} parent=1 // pred_check
      _
    $region15: #{decoder_apply.1} parent=1 // pred_check_branch
      %34 = sbr.rel (0) target = $region17
    $region16: #{decoder_apply.1} parent=1 // pred_region
      %s36 = ssub.s32 1024, 1024
      %37 = vsyncadd [#allocation5], %s36
      %s38 = sshll.u32 [#allocation4], 4
      %s39 = int_to_ptr.vmem [resolvable:$true] %s38
      %44 = dma.hbm_to_vmem [thread:$0]  %s3, 1024, %s39, [#allocation5], 64, 64, 4
    $region17: #{decoder_apply.1} parent=1 // pred_fallthru
      _
    // Predicated region
    $region18: #{decoder_apply.1} parent=1 // pred_check
      _
    $region19: #{decoder_apply.1} parent=1 // pred_check_branch
      %46 = sbr.rel (0) target = $region21
    $region20: #{decoder_apply.1} parent=1 // pred_region
      _
    $region21: #{decoder_apply.1} parent=1 // pred_fallthru
      _
    // Predicated region
    $region22: #{decoder_apply.1} parent=1 // pred_check
      _
    $region23: #{decoder_apply.1} parent=1 // pred_check_branch
      %48 = sbr.rel (0) target = $region25
    $region24: #{decoder_apply.1} parent=1 // pred_region
      %s50 = ssub.s32 1024, 1024
      %51 = vsyncadd [#allocation5], %s50
      %s52 = sshll.u32 [#allocation6], 4
      %s53 = int_to_ptr.vmem [resolvable:$true] %s52
      %58 = dma.hbm_to_vmem [thread:$0]  %s5, 1024, %s53, [#allocation5], 64, 64, 4
    $region25: #{decoder_apply.1} parent=1 // pred_fallthru
      _
    // Predicated region
    $region26: #{decoder_apply.1} parent=1 // pred_check
      _
    $region27: #{decoder_apply.1} parent=1 // pred_check_branch
      %60 = sbr.rel (0) target = $region29
    $region28: #{decoder_apply.1} parent=1 // pred_region
      _
    $region29: #{decoder_apply.1} parent=1 // pred_fallthru
      _
    // Predicated region
    $region30: #{decoder_apply.1} parent=1 // pred_check
      _
    $region31: #{decoder_apply.1} parent=1 // pred_check_branch
      %62 = sbr.rel (0) target = $region33
    $region32: #{decoder_apply.1} parent=1 // pred_region
      %s64 = ssub.s32 1024, 1024
      %65 = vsyncadd [#allocation8], %s64
      %s66 = sshll.u32 [#allocation7], 4
      %s67 = int_to_ptr.vmem [resolvable:$true] %s66
      %72 = dma.hbm_to_vmem [thread:$0]  %s7, 1024, %s67, [#allocation8], 64, 64, 4
    $region33: #{decoder_apply.1} parent=1 // pred_fallthru
      _
    // Predicated region
    $region34: #{decoder_apply.1} parent=1 // pred_check
      _
    $region35: #{decoder_apply.1} parent=1 // pred_check_branch
      %74 = sbr.rel (0) target = $region37
    $region36: #{decoder_apply.1} parent=1 // pred_region
      _
    $region37: #{decoder_apply.1} parent=1 // pred_fallthru
      _
    // Predicated region
    $region38: #{decoder_apply.1} parent=1 // pred_check
      _
    $region39: #{decoder_apply.1} parent=1 // pred_check_branch
      %76 = sbr.rel (0) target = $region41
    $region40: #{decoder_apply.1} parent=1 // pred_region
      %77 = dma.done [#allocation3], 1024
    $region41: #{decoder_apply.1} parent=1 // pred_fallthru
      _
    // Predicated region
    $region42: #{decoder_apply.1} parent=1 // pred_check
      _
    $region43: #{decoder_apply.1} parent=1 // pred_check_branch
      %79 = sbr.rel (0) target = $region45
    $region44: #{decoder_apply.1} parent=1 // pred_region
      %80 = dma.done [#allocation5], 1024
    $region45: #{decoder_apply.1} parent=1 // pred_fallthru
      _
    // Predicated region
    $region46: #{decoder_apply.1} parent=1 // pred_check
      _
    $region47: #{decoder_apply.1} parent=1 // pred_check_branch
      %82 = sbr.rel (0) target = $region49
    $region48: #{decoder_apply.1} parent=1 // pred_region
      %83 = dma.done [#allocation5], 1024
    $region49: #{decoder_apply.1} parent=1 // pred_fallthru
      _
    // Predicated region
    $region50: #{decoder_apply.1} parent=1 // pred_check
      _
    $region51: #{decoder_apply.1} parent=1 // pred_check_branch
      %85 = sbr.rel (0) target = $region53
    $region52: #{decoder_apply.1} parent=1 // pred_region
      %86 = dma.done [#allocation8], 1024
    $region53: #{decoder_apply.1} parent=1 // pred_fallthru
      _
    %v88 = vld [vmem:[%s0] sm:$0xff]
    %v89 = vpack.c.bf16 %v88, %v88
    %v90 = vld [vmem:[#allocation2] sm:$0xf]
    %v91 = vld [vmem:[#allocation2 + $0x4] sm:$0xf]
    %v92 = vld [vmem:[#allocation2 + $0x8] sm:$0xf]
    %v93 = vld [vmem:[#allocation2 + $0xc] sm:$0xf]
    %v94 = vld [vmem:[#allocation2 + $0x10] sm:$0xf]
    %v95 = vld [vmem:[#allocation2 + $0x14] sm:$0xf]
    %v96 = vld [vmem:[#allocation2 + $0x18] sm:$0xf]
    %v97 = vld [vmem:[#allocation2 + $0x1c] sm:$0xf]
    %v98 = vld [vmem:[#allocation2 + $0x20] sm:$0xf]
    %v99 = vld [vmem:[#allocation2 + $0x24] sm:$0xf]
    %v100 = vld [vmem:[#allocation2 + $0x28] sm:$0xf]
    %v101 = vld [vmem:[#allocation2 + $0x2c] sm:$0xf]
    %v102 = vld [vmem:[#allocation2 + $0x30] sm:$0xf]
    %v103 = vld [vmem:[#allocation2 + $0x34] sm:$0xf]
    %v104 = vld [vmem:[#allocation2 + $0x38] sm:$0xf]
    %v105 = vld [vmem:[#allocation2 + $0x3c] sm:$0xf]
    %v122 = vunpack.c.l.b16 %v90
    %v123 = vunpack.c.l.b16 %v91
    %v124 = vunpack.c.l.b16 %v92
    %v125 = vunpack.c.l.b16 %v93
    %v126 = vunpack.c.l.b16 %v94
    %v127 = vunpack.c.l.b16 %v95
    %v128 = vunpack.c.l.b16 %v96
    %v129 = vunpack.c.l.b16 %v97
    %v130 = vunpack.c.l.b16 %v98
    %v131 = vunpack.c.l.b16 %v99
    %v132 = vunpack.c.l.b16 %v100
    %v133 = vunpack.c.l.b16 %v101
    %v134 = vunpack.c.l.b16 %v102
    %v135 = vunpack.c.l.b16 %v103
    %v136 = vunpack.c.l.b16 %v104
    %v137 = vunpack.c.l.b16 %v105
    %v138 = vpack.c.b16 %v123, %v122
    %v139 = vpack.c.b16 %v125, %v124
    %v140 = vpack.c.b16 %v127, %v126
    %v141 = vpack.c.b16 %v129, %v128
    %v142 = vpack.c.b16 %v131, %v130
    %v143 = vpack.c.b16 %v133, %v132
    %v144 = vpack.c.b16 %v135, %v134
    %v145 = vpack.c.b16 %v137, %v136
    %154 = vmatprep.subr.bf16.mxu0 0
    %155 = vmatpush1.bf16.msra.mxu0 %v138
    %156 = vmatprep.subr.bf16.mxu0 0
    %157 = vmatpush1.bf16.msra.mxu0 %v139
    %158 = vmatprep.subr.bf16.mxu0 0
    %159 = vmatpush1.bf16.msra.mxu0 %v140
    %160 = vmatprep.subr.bf16.mxu0 0
    %161 = vmatpush1.bf16.msra.mxu0 %v141
    %162 = vmatprep.subr.bf16.mxu0 0
    %163 = vmatpush1.bf16.msra.mxu0 %v142
    %164 = vmatprep.subr.bf16.mxu0 0
    %165 = vmatpush1.bf16.msra.mxu0 %v143
    %166 = vmatprep.subr.bf16.mxu0 0
    %167 = vmatpush1.bf16.msra.mxu0 %v144
    %168 = vmatprep.subr.bf16.mxu0 0
    %169 = vmatpush1.bf16.msra.mxu0 %v145
    %170 = vmatprep.subr.bf16.mxu0 0
    %171 = vmatpush1.bf16.msra.mxu0 0
    %172 = vmatprep.subr.bf16.mxu0 0
    %173 = vmatpush1.bf16.msra.mxu0 0
    %174 = vmatprep.subr.bf16.mxu0 0
    %175 = vmatpush1.bf16.msra.mxu0 0
    %176 = vmatprep.subr.bf16.mxu0 0
    %177 = vmatpush1.bf16.msra.mxu0 0
    %178 = vmatprep.subr.bf16.mxu0 0
    %179 = vmatpush1.bf16.msra.mxu0 0
    %180 = vmatprep.subr.bf16.mxu0 0
    %181 = vmatpush1.bf16.msra.mxu0 0
    %182 = vmatprep.subr.bf16.mxu0 0
    %183 = vmatpush1.bf16.msra.mxu0 0
    %184 = vmatprep.subr.bf16.mxu0 0
    %185 = vmatpush1.bf16.msra.mxu0 0
    %186 = vmatprep.mubr.bf16.mxu0 0
    %187 = vmatmul.mubr.bf16.gmra.mrb[0].mxu0 %v89
    %v188 = vpop.f32.mrb[0].mxu0
    %v189 = vadd.f32 0.0, %v188
    %v190 = vpop.f32.mrb[0].mxu0
    %v191 = vpop.f32.mrb[0].mxu0
    %v192 = vpop.f32.mrb[0].mxu0
    %193 = vdwg.mxu0
    %v194 = vrot.slane %v189, 4
    %v195 = vadd.f32 %v189, %v194
    %v196 = vrot.slane %v195, 2
    %v197 = vadd.f32 %v195, %v196
    %v198 = vrot.slane %v197, 1
    %v199 = vadd.f32 %v197, %v198
    %v200 = vrcp.pop 8.0
    %v201 = vmul.f32 %v199, %v200
    %v202 = vsub.f32 %v189, %v201
    %v203 = vmul.f32 %v202, %v202
    %v204 = vrot.slane %v203, 4
    %v205 = vadd.f32 %v203, %v204
    %v206 = vrot.slane %v205, 2
    %v207 = vadd.f32 %v205, %v206
    %v208 = vrot.slane %v207, 1
    %v209 = vadd.f32 %v207, %v208
    %v210 = vmul.f32 %v209, %v200
    %v211 = vld [vmem:[%s2] sm:$0x1]
    %v212 = vadd.f32 %v210, 1e-05
    %v213 = vrsqrt.pop %v212
    %v214 = vmul.f32 %v211, %v213
    %v215 = vlaneseq
    %v216 = vshrl.u32 %v215, 7
    %v217 = vsub.s32 0, %v216
    %v218 = vrot.slane %v214, %v217
    %v219 = vmul.f32 %v202, %v218
    %v220 = vld [vmem:[%s2 + $0x1] sm:$0x1]
    %v221 = vlaneseq
    %v222 = vshrl.u32 %v221, 7
    %v223 = vsub.s32 0, %v222
    %v224 = vrot.slane %v220, %v223
    %v225 = vadd.f32 %v219, %v224
    %v226 = vmul.f32 %v225, 0.5
    %v227 = vtanh.pop %v226
    %v228 = vmul.f32 %v227, 0.5
    %v229 = vadd.f32 %v228, 0.5
    %v230 = vpack.c.bf16 %v229, %v229
    %v231 = vld [vmem:[#allocation4] sm:$0xf]
    %v232 = vld [vmem:[#allocation4 + $0x4] sm:$0xf]
    %v233 = vld [vmem:[#allocation4 + $0x8] sm:$0xf]
    %v234 = vld [vmem:[#allocation4 + $0xc] sm:$0xf]
    %v235 = vld [vmem:[#allocation4 + $0x10] sm:$0xf]
    %v236 = vld [vmem:[#allocation4 + $0x14] sm:$0xf]
    %v237 = vld [vmem:[#allocation4 + $0x18] sm:$0xf]
    %v238 = vld [vmem:[#allocation4 + $0x1c] sm:$0xf]
    %v239 = vld [vmem:[#allocation4 + $0x20] sm:$0xf]
    %v240 = vld [vmem:[#allocation4 + $0x24] sm:$0xf]
    %v241 = vld [vmem:[#allocation4 + $0x28] sm:$0xf]
    %v242 = vld [vmem:[#allocation4 + $0x2c] sm:$0xf]
    %v243 = vld [vmem:[#allocation4 + $0x30] sm:$0xf]
    %v244 = vld [vmem:[#allocation4 + $0x34] sm:$0xf]
    %v245 = vld [vmem:[#allocation4 + $0x38] sm:$0xf]
    %v246 = vld [vmem:[#allocation4 + $0x3c] sm:$0xf]
    %v263 = vunpack.c.l.b16 %v231
    %v264 = vunpack.c.l.b16 %v232
    %v265 = vunpack.c.l.b16 %v233
    %v266 = vunpack.c.l.b16 %v234
    %v267 = vunpack.c.l.b16 %v235
    %v268 = vunpack.c.l.b16 %v236
    %v269 = vunpack.c.l.b16 %v237
    %v270 = vunpack.c.l.b16 %v238
    %v271 = vunpack.c.l.b16 %v239
    %v272 = vunpack.c.l.b16 %v240
    %v273 = vunpack.c.l.b16 %v241
    %v274 = vunpack.c.l.b16 %v242
    %v275 = vunpack.c.l.b16 %v243
    %v276 = vunpack.c.l.b16 %v244
    %v277 = vunpack.c.l.b16 %v245
    %v278 = vunpack.c.l.b16 %v246
    %v279 = vpack.c.b16 %v264, %v263
    %v280 = vpack.c.b16 %v266, %v265
    %v281 = vpack.c.b16 %v268, %v267
    %v282 = vpack.c.b16 %v270, %v269
    %v283 = vpack.c.b16 %v272, %v271
    %v284 = vpack.c.b16 %v274, %v273
    %v285 = vpack.c.b16 %v276, %v275
    %v286 = vpack.c.b16 %v278, %v277
    %295 = vmatprep.subr.bf16.mxu0 0
    %296 = vmatpush1.bf16.msra.mxu0 %v279
    %297 = vmatprep.subr.bf16.mxu0 0
    %298 = vmatpush1.bf16.msra.mxu0 %v280
    %299 = vmatprep.subr.bf16.mxu0 0
    %300 = vmatpush1.bf16.msra.mxu0 %v281
    %301 = vmatprep.subr.bf16.mxu0 0
    %302 = vmatpush1.bf16.msra.mxu0 %v282
    %303 = vmatprep.subr.bf16.mxu0 0
    %304 = vmatpush1.bf16.msra.mxu0 %v283
    %305 = vmatprep.subr.bf16.mxu0 0
    %306 = vmatpush1.bf16.msra.mxu0 %v284
    %307 = vmatprep.subr.bf16.mxu0 0
    %308 = vmatpush1.bf16.msra.mxu0 %v285
    %309 = vmatprep.subr.bf16.mxu0 0
    %310 = vmatpush1.bf16.msra.mxu0 %v286
    %311 = vmatprep.subr.bf16.mxu0 0
    %312 = vmatpush1.bf16.msra.mxu0 0
    %313 = vmatprep.subr.bf16.mxu0 0
    %314 = vmatpush1.bf16.msra.mxu0 0
    %315 = vmatprep.subr.bf16.mxu0 0
    %316 = vmatpush1.bf16.msra.mxu0 0
    %317 = vmatprep.subr.bf16.mxu0 0
    %318 = vmatpush1.bf16.msra.mxu0 0
    %319 = vmatprep.subr.bf16.mxu0 0
    %320 = vmatpush1.bf16.msra.mxu0 0
    %321 = vmatprep.subr.bf16.mxu0 0
    %322 = vmatpush1.bf16.msra.mxu0 0
    %323 = vmatprep.subr.bf16.mxu0 0
    %324 = vmatpush1.bf16.msra.mxu0 0
    %325 = vmatprep.subr.bf16.mxu0 0
    %326 = vmatpush1.bf16.msra.mxu0 0
    %327 = vmatprep.mubr.bf16.mxu0 0
    %328 = vmatmul.mubr.bf16.gmra.mrb[0].mxu0 %v230
    %v329 = vpop.f32.mrb[0].mxu0
    %v330 = vadd.f32 0.0, %v329
    %v331 = vpop.f32.mrb[0].mxu0
    %v332 = vpop.f32.mrb[0].mxu0
    %v333 = vpop.f32.mrb[0].mxu0
    %334 = vdwg.mxu0
    %v335 = vrot.slane %v330, 4
    %v336 = vadd.f32 %v330, %v335
    %v337 = vrot.slane %v336, 2
    %v338 = vadd.f32 %v336, %v337
    %v339 = vrot.slane %v338, 1
    %v340 = vadd.f32 %v338, %v339
    %v341 = vmul.f32 %v340, %v200
    %v342 = vsub.f32 %v330, %v341
    %v343 = vmul.f32 %v342, %v342
    %v344 = vrot.slane %v343, 4
    %v345 = vadd.f32 %v343, %v344
    %v346 = vrot.slane %v345, 2
    %v347 = vadd.f32 %v345, %v346
    %v348 = vrot.slane %v347, 1
    %v349 = vadd.f32 %v347, %v348
    %v350 = vmul.f32 %v349, %v200
    %v351 = vld [vmem:[%s4] sm:$0x1]
    %v352 = vadd.f32 %v350, 1e-05
    %v353 = vrsqrt.pop %v352
    %v354 = vmul.f32 %v351, %v353
    %v355 = vlaneseq
    %v356 = vshrl.u32 %v355, 7
    %v357 = vsub.s32 0, %v356
    %v358 = vrot.slane %v354, %v357
    %v359 = vmul.f32 %v342, %v358
    %v360 = vld [vmem:[%s4 + $0x1] sm:$0x1]
    %v361 = vlaneseq
    %v362 = vshrl.u32 %v361, 7
    %v363 = vsub.s32 0, %v362
    %v364 = vrot.slane %v360, %v363
    %v365 = vadd.f32 %v359, %v364
    %v366 = vmul.f32 %v365, 0.5
    %v367 = vtanh.pop %v366
    %v368 = vmul.f32 %v367, 0.5
    %v369 = vadd.f32 %v368, 0.5
    %v370 = vpack.c.bf16 %v369, %v369
    %v371 = vld [vmem:[#allocation6] sm:$0xf]
    %v372 = vld [vmem:[#allocation6 + $0x4] sm:$0xf]
    %v373 = vld [vmem:[#allocation6 + $0x8] sm:$0xf]
    %v374 = vld [vmem:[#allocation6 + $0xc] sm:$0xf]
    %v375 = vld [vmem:[#allocation6 + $0x10] sm:$0xf]
    %v376 = vld [vmem:[#allocation6 + $0x14] sm:$0xf]
    %v377 = vld [vmem:[#allocation6 + $0x18] sm:$0xf]
    %v378 = vld [vmem:[#allocation6 + $0x1c] sm:$0xf]
    %v379 = vld [vmem:[#allocation6 + $0x20] sm:$0xf]
    %v380 = vld [vmem:[#allocation6 + $0x24] sm:$0xf]
    %v381 = vld [vmem:[#allocation6 + $0x28] sm:$0xf]
    %v382 = vld [vmem:[#allocation6 + $0x2c] sm:$0xf]
    %v383 = vld [vmem:[#allocation6 + $0x30] sm:$0xf]
    %v384 = vld [vmem:[#allocation6 + $0x34] sm:$0xf]
    %v385 = vld [vmem:[#allocation6 + $0x38] sm:$0xf]
    %v386 = vld [vmem:[#allocation6 + $0x3c] sm:$0xf]
    %v403 = vunpack.c.l.b16 %v371
    %v404 = vunpack.c.l.b16 %v372
    %v405 = vunpack.c.l.b16 %v373
    %v406 = vunpack.c.l.b16 %v374
    %v407 = vunpack.c.l.b16 %v375
    %v408 = vunpack.c.l.b16 %v376
    %v409 = vunpack.c.l.b16 %v377
    %v410 = vunpack.c.l.b16 %v378
    %v411 = vunpack.c.l.b16 %v379
    %v412 = vunpack.c.l.b16 %v380
    %v413 = vunpack.c.l.b16 %v381
    %v414 = vunpack.c.l.b16 %v382
    %v415 = vunpack.c.l.b16 %v383
    %v416 = vunpack.c.l.b16 %v384
    %v417 = vunpack.c.l.b16 %v385
    %v418 = vunpack.c.l.b16 %v386
    %v419 = vpack.c.b16 %v404, %v403
    %v420 = vpack.c.b16 %v406, %v405
    %v421 = vpack.c.b16 %v408, %v407
    %v422 = vpack.c.b16 %v410, %v409
    %v423 = vpack.c.b16 %v412, %v411
    %v424 = vpack.c.b16 %v414, %v413
    %v425 = vpack.c.b16 %v416, %v415
    %v426 = vpack.c.b16 %v418, %v417
    %435 = vmatprep.subr.bf16.mxu0 0
    %436 = vmatpush1.bf16.msra.mxu0 %v419
    %437 = vmatprep.subr.bf16.mxu0 0
    %438 = vmatpush1.bf16.msra.mxu0 %v420
    %439 = vmatprep.subr.bf16.mxu0 0
    %440 = vmatpush1.bf16.msra.mxu0 %v421
    %441 = vmatprep.subr.bf16.mxu0 0
    %442 = vmatpush1.bf16.msra.mxu0 %v422
    %443 = vmatprep.subr.bf16.mxu0 0
    %444 = vmatpush1.bf16.msra.mxu0 %v423
    %445 = vmatprep.subr.bf16.mxu0 0
    %446 = vmatpush1.bf16.msra.mxu0 %v424
    %447 = vmatprep.subr.bf16.mxu0 0
    %448 = vmatpush1.bf16.msra.mxu0 %v425
    %449 = vmatprep.subr.bf16.mxu0 0
    %450 = vmatpush1.bf16.msra.mxu0 %v426
    %451 = vmatprep.subr.bf16.mxu0 0
    %452 = vmatpush1.bf16.msra.mxu0 0
    %453 = vmatprep.subr.bf16.mxu0 0
    %454 = vmatpush1.bf16.msra.mxu0 0
    %455 = vmatprep.subr.bf16.mxu0 0
    %456 = vmatpush1.bf16.msra.mxu0 0
    %457 = vmatprep.subr.bf16.mxu0 0
    %458 = vmatpush1.bf16.msra.mxu0 0
    %459 = vmatprep.subr.bf16.mxu0 0
    %460 = vmatpush1.bf16.msra.mxu0 0
    %461 = vmatprep.subr.bf16.mxu0 0
    %462 = vmatpush1.bf16.msra.mxu0 0
    %463 = vmatprep.subr.bf16.mxu0 0
    %464 = vmatpush1.bf16.msra.mxu0 0
    %465 = vmatprep.subr.bf16.mxu0 0
    %466 = vmatpush1.bf16.msra.mxu0 0
    %467 = vmatprep.mubr.bf16.mxu0 0
    %468 = vmatmul.mubr.bf16.gmra.mrb[0].mxu0 %v370
    %v469 = vpop.f32.mrb[0].mxu0
    %v470 = vadd.f32 0.0, %v469
    %v471 = vpop.f32.mrb[0].mxu0
    %v472 = vpop.f32.mrb[0].mxu0
    %v473 = vpop.f32.mrb[0].mxu0
    %474 = vdwg.mxu0
    %v475 = vrot.slane %v470, 4
    %v476 = vadd.f32 %v470, %v475
    %v477 = vrot.slane %v476, 2
    %v478 = vadd.f32 %v476, %v477
    %v479 = vrot.slane %v478, 1
    %v480 = vadd.f32 %v478, %v479
    %v481 = vmul.f32 %v480, %v200
    %v482 = vsub.f32 %v470, %v481
    %v483 = vmul.f32 %v482, %v482
    %v484 = vrot.slane %v483, 4
    %v485 = vadd.f32 %v483, %v484
    %v486 = vrot.slane %v485, 2
    %v487 = vadd.f32 %v485, %v486
    %v488 = vrot.slane %v487, 1
    %v489 = vadd.f32 %v487, %v488
    %v490 = vmul.f32 %v489, %v200
    %v491 = vld [vmem:[%s6] sm:$0x1]
    %v492 = vadd.f32 %v490, 1e-05
    %v493 = vrsqrt.pop %v492
    %v494 = vmul.f32 %v491, %v493
    %v495 = vlaneseq
    %v496 = vshrl.u32 %v495, 7
    %v497 = vsub.s32 0, %v496
    %v498 = vrot.slane %v494, %v497
    %v499 = vmul.f32 %v482, %v498
    %v500 = vld [vmem:[%s6 + $0x1] sm:$0x1]
    %v501 = vlaneseq
    %v502 = vshrl.u32 %v501, 7
    %v503 = vsub.s32 0, %v502
    %v504 = vrot.slane %v500, %v503
    %v505 = vadd.f32 %v499, %v504
    %v506 = vmul.f32 %v505, 0.5
    %v507 = vtanh.pop %v506
    %v508 = vmul.f32 %v507, 0.5
    %v509 = vadd.f32 %v508, 0.5
    %v510 = vpack.c.bf16 %v509, %v509
    %v511 = vld [vmem:[#allocation7] sm:$0xf]
    %v512 = vld [vmem:[#allocation7 + $0x4] sm:$0xf]
    %v513 = vld [vmem:[#allocation7 + $0x8] sm:$0xf]
    %v514 = vld [vmem:[#allocation7 + $0xc] sm:$0xf]
    %v515 = vld [vmem:[#allocation7 + $0x10] sm:$0xf]
    %v516 = vld [vmem:[#allocation7 + $0x14] sm:$0xf]
    %v517 = vld [vmem:[#allocation7 + $0x18] sm:$0xf]
    %v518 = vld [vmem:[#allocation7 + $0x1c] sm:$0xf]
    %v519 = vld [vmem:[#allocation7 + $0x20] sm:$0xf]
    %v520 = vld [vmem:[#allocation7 + $0x24] sm:$0xf]
    %v521 = vld [vmem:[#allocation7 + $0x28] sm:$0xf]
    %v522 = vld [vmem:[#allocation7 + $0x2c] sm:$0xf]
    %v523 = vld [vmem:[#allocation7 + $0x30] sm:$0xf]
    %v524 = vld [vmem:[#allocation7 + $0x34] sm:$0xf]
    %v525 = vld [vmem:[#allocation7 + $0x38] sm:$0xf]
    %v526 = vld [vmem:[#allocation7 + $0x3c] sm:$0xf]
    %v543 = vunpack.c.l.b16 %v511
    %v544 = vunpack.c.l.b16 %v512
    %v545 = vunpack.c.l.b16 %v513
    %v546 = vunpack.c.l.b16 %v514
    %v547 = vunpack.c.l.b16 %v515
    %v548 = vunpack.c.l.b16 %v516
    %v549 = vunpack.c.l.b16 %v517
    %v550 = vunpack.c.l.b16 %v518
    %v551 = vunpack.c.l.b16 %v519
    %v552 = vunpack.c.l.b16 %v520
    %v553 = vunpack.c.l.b16 %v521
    %v554 = vunpack.c.l.b16 %v522
    %v555 = vunpack.c.l.b16 %v523
    %v556 = vunpack.c.l.b16 %v524
    %v557 = vunpack.c.l.b16 %v525
    %v558 = vunpack.c.l.b16 %v526
    %v559 = vpack.c.b16 %v544, %v543
    %v560 = vpack.c.b16 %v546, %v545
    %v561 = vpack.c.b16 %v548, %v547
    %v562 = vpack.c.b16 %v550, %v549
    %v563 = vpack.c.b16 %v552, %v551
    %v564 = vpack.c.b16 %v554, %v553
    %v565 = vpack.c.b16 %v556, %v555
    %v566 = vpack.c.b16 %v558, %v557
    %575 = vmatprep.subr.bf16.mxu0 0
    %576 = vmatpush1.bf16.msra.mxu0 %v559
    %577 = vmatprep.subr.bf16.mxu0 0
    %578 = vmatpush1.bf16.msra.mxu0 %v560
    %579 = vmatprep.subr.bf16.mxu0 0
    %580 = vmatpush1.bf16.msra.mxu0 %v561
    %581 = vmatprep.subr.bf16.mxu0 0
    %582 = vmatpush1.bf16.msra.mxu0 %v562
    %583 = vmatprep.subr.bf16.mxu0 0
    %584 = vmatpush1.bf16.msra.mxu0 %v563
    %585 = vmatprep.subr.bf16.mxu0 0
    %586 = vmatpush1.bf16.msra.mxu0 %v564
    %587 = vmatprep.subr.bf16.mxu0 0
    %588 = vmatpush1.bf16.msra.mxu0 %v565
    %589 = vmatprep.subr.bf16.mxu0 0
    %590 = vmatpush1.bf16.msra.mxu0 %v566
    %591 = vmatprep.subr.bf16.mxu0 0
    %592 = vmatpush1.bf16.msra.mxu0 0
    %593 = vmatprep.subr.bf16.mxu0 0
    %594 = vmatpush1.bf16.msra.mxu0 0
    %595 = vmatprep.subr.bf16.mxu0 0
    %596 = vmatpush1.bf16.msra.mxu0 0
    %597 = vmatprep.subr.bf16.mxu0 0
    %598 = vmatpush1.bf16.msra.mxu0 0
    %599 = vmatprep.subr.bf16.mxu0 0
    %600 = vmatpush1.bf16.msra.mxu0 0
    %601 = vmatprep.subr.bf16.mxu0 0
    %602 = vmatpush1.bf16.msra.mxu0 0
    %603 = vmatprep.subr.bf16.mxu0 0
    %604 = vmatpush1.bf16.msra.mxu0 0
    %605 = vmatprep.subr.bf16.mxu0 0
    %606 = vmatpush1.bf16.msra.mxu0 0
    %607 = vmatprep.mubr.bf16.mxu0 0
    %608 = vmatmul.mubr.bf16.gmra.mrb[0].mxu0 %v510
    %v609 = vpop.f32.mrb[0].mxu0
    %v610 = vadd.f32 0.0, %v609
    %v611 = vpop.f32.mrb[0].mxu0
    %v612 = vpop.f32.mrb[0].mxu0
    %v613 = vpop.f32.mrb[0].mxu0
    %614 = vdwg.mxu0
    %v615 = vrot.slane %v610, 4
    %v616 = vadd.f32 %v610, %v615
    %v617 = vrot.slane %v616, 2
    %v618 = vadd.f32 %v616, %v617
    %v619 = vrot.slane %v618, 1
    %v620 = vadd.f32 %v618, %v619
    %v621 = vmul.f32 %v620, %v200
    %v622 = vsub.f32 %v610, %v621
    %v623 = vmul.f32 %v622, %v622
    %v624 = vrot.slane %v623, 4
    %v625 = vadd.f32 %v623, %v624
    %v626 = vrot.slane %v625, 2
    %v627 = vadd.f32 %v625, %v626
    %v628 = vrot.slane %v627, 1
    %v629 = vadd.f32 %v627, %v628
    %v630 = vmul.f32 %v629, %v200
    %v631 = vld [vmem:[%s8] sm:$0x1]
    %v632 = vadd.f32 %v630, 1e-05
    %v633 = vrsqrt.pop %v632
    %v634 = vmul.f32 %v631, %v633
    %v635 = vlaneseq
    %v636 = vshrl.u32 %v635, 7
    %v637 = vsub.s32 0, %v636
    %v638 = vrot.slane %v634, %v637
    %v639 = vmul.f32 %v622, %v638
    %v640 = vld [vmem:[%s8 + $0x1] sm:$0x1]
    %v641 = vlaneseq
    %v642 = vshrl.u32 %v641, 7
    %v643 = vsub.s32 0, %v642
    %v644 = vrot.slane %v640, %v643
    %v645 = vadd.f32 %v639, %v644
    %v646 = vmul.f32 %v645, 0.5
    %v647 = vtanh.pop %v646
    %v648 = vmul.f32 %v647, 0.5
    %v649 = vadd.f32 %v648, 0.5
    %650 = vst [vmem:[%s9] sm:$0xff] %v649
    // Predicated region
    $region54: #{decoder_apply.1} parent=1 // pred_check
      _
    $region55: #{decoder_apply.1} parent=1 // pred_check_branch
      %652 = sbr.rel (0) target = $region57
    $region56: #{decoder_apply.1} parent=1 // pred_region
      _
    $region57: #{decoder_apply.1} parent=1 // pred_fallthru
      _
    // Predicated region
    $region58: #{decoder_apply.1} parent=1 // pred_check
      _
    $region59: #{decoder_apply.1} parent=1 // pred_check_branch
      %654 = sbr.rel (0) target = $region61
    $region60: #{decoder_apply.1} parent=1 // pred_region
      _
    $region61: #{decoder_apply.1} parent=1 // pred_fallthru
      _
    %655 = vsyncpa [#allocation3], 1
    %656 = vsyncpa [#allocation5], 1
    %657 = vsyncpa [#allocation8], 1

</llo_original>
